<compile_context>
chip_gen: v5e
topology: v5e:2x2
jax: 0.10.0
libtpu: 0.0.40
codegen_flags: <defaults>
</compile_context>

<pallas_src>
import jax
import jax.numpy as jnp
from jax import lax
from jax.experimental import pallas as pl
from jax.experimental.pallas import tpu as pltpu


# --------------------------------------------------------------------------
# Per-generation configuration.
# --------------------------------------------------------------------------
def _device_config():
    try:
        kind = jax.devices()[0].device_kind.lower()
    except Exception:
        kind = ""
    is_v7 = "v7" in kind
    if is_v7:
        vmem = 48 * 1024 * 1024            # 64 MiB physical on v7x; headroom
    elif ("v5" in kind) or ("v6" in kind):
        vmem = 100 * 1024 * 1024           # 128 MiB physical on v5e/v6e
    else:
        vmem = 32 * 1024 * 1024            # conservative default
    num_tc = 2 if is_v7 else 1             # v7x: 2 TensorCores; v5e/v6e: 1
    use_bf16_tanh = is_v7 or ("v6" in kind)  # bf16 EUP path on v6e/v7x only
    return num_tc, vmem, use_bf16_tanh, is_v7


def _vmem_resident():
    # Whole-array, single-copy VMEM resident for loop-invariant weights/biases.
    return pl.BlockSpec(memory_space=pltpu.MemorySpace.VMEM)


# --------------------------------------------------------------------------
# Generic dense (x @ W + b) kernel, tiled over rows and output columns.
# Used for (a) the hoisted embedding->gates projection, (b) the vocab fc.
# --------------------------------------------------------------------------
def dense_kernel(x_ref, w_ref, b_ref, o_ref):
    o_ref[...] = (jnp.dot(x_ref[...], w_ref[...],
                          preferred_element_type=jnp.float32)
                  + b_ref[...]).astype(o_ref.dtype)


def dense(x, w, b, out_dtype, vmem_limit):
    M, K = x.shape
    N = w.shape[1]
    TM = M if M <= 256 else (256 if M % 256 == 0 else (128 if M % 128 == 0 else M))
    TN = N if N <= 512 else (256 if N % 256 == 0 else (128 if N % 128 == 0 else N))
    return pl.pallas_call(
        dense_kernel,
        out_shape=jax.ShapeDtypeStruct((M, N), out_dtype),
        grid_spec=pltpu.PrefetchScalarGridSpec(
            num_scalar_prefetch=0,
            grid=(M // TM, N // TN),
            in_specs=[pl.BlockSpec((TM, K), lambda i, j: (i, 0)),
                      pl.BlockSpec((K, TN), lambda i, j: (0, j)),
                      pl.BlockSpec((1, TN), lambda i, j: (0, j))],
            out_specs=pl.BlockSpec((TM, TN), lambda i, j: (i, j))),
        compiler_params=pltpu.CompilerParams(
            dimension_semantics=("parallel", "parallel"),
            vmem_limit_bytes=vmem_limit),
    )(x, w, b)


# --------------------------------------------------------------------------
# Recurrent kernel: one grid step == one independent batch block; the full
# caption loop runs inside via lax.fori_loop with (h, c) carried in registers.
# --------------------------------------------------------------------------
def _make_decoder_kernel(L_actual, L_pad, use_bf16_tanh):
    def decoder_kernel(feat_ref, eg_ref,
                       Ww_ref, Wb_ref, Uw_ref, Ub_ref, vw_ref, vb_ref,
                       wc_ref, whh_ref,
                       ihw_ref, ihb_ref, icw_ref, icb_ref,
                       h_out_ref, attn_ref):
        feat = feat_ref[...]                                  # (BB, Lp, F) bf16
        BB, Lp, F = feat.shape
        H = Uw_ref.shape[0]
        seq_len = h_out_ref.shape[0]

        feat_f32 = feat.astype(jnp.float32)

        # ---- init_hidden(features) : loop-invariant (padded rows are zero) ----
        fmean = jnp.sum(feat_f32, axis=1) * (1.0 / float(L_actual))
        fmean_bf = fmean.astype(jnp.bfloat16)
        h0 = (jnp.dot(fmean_bf, ihw_ref[...],
                      preferred_element_type=jnp.float32) + ihb_ref[...])
        c0 = (jnp.dot(fmean_bf, icw_ref[...],
                      preferred_element_type=jnp.float32) + icb_ref[...])

        # ---- hoisted attention projection W(features) : loop-invariant ----
        wfeat = (jnp.dot(feat.reshape(BB * Lp, F), Ww_ref[...],
                         preferred_element_type=jnp.float32).reshape(BB, Lp, H)
                 + Wb_ref[...])                               # (BB, Lp, H) f32

        Uw = Uw_ref[...]
        Ub = Ub_ref[...]
        vw = vw_ref[...]                                      # (1, H) f32
        vb = vb_ref[...]                                      # (1, 1) f32
        wc = wc_ref[...]                                      # (F, 4H) bf16
        whh = whh_ref[...]                                    # (H, 4H) bf16

        if L_pad != L_actual:
            lane_mask = lax.broadcasted_iota(jnp.int32, (1, Lp), 1) < L_actual
        else:
            lane_mask = None

        def step(t, carry):
            h, c = carry                                      # (BB, H) f32

            # ---- Attention(features, h) ----
            u = (jnp.dot(h.astype(jnp.bfloat16), Uw,
                         preferred_element_type=jnp.float32) + Ub)     # (BB, H)
            pre = wfeat + u[:, None, :]                                # (BB, Lp, H)
            if use_bf16_tanh:
                tt = jnp.tanh(pre.astype(jnp.bfloat16))                # bf16 EUP
            else:
                tt = jnp.tanh(pre)                                     # f32 (v5e)
            scores = jnp.sum(tt.astype(jnp.float32) * vw, axis=-1) + vb  # (BB, Lp)
            if lane_mask is not None:
                scores = jnp.where(lane_mask, scores, -1e30)
            s = scores - jnp.max(scores, axis=1, keepdims=True)
            e = jnp.exp(s)
            weights = e * pl.reciprocal(jnp.sum(e, axis=1, keepdims=True),
                                        approx=True)
            # Weighted feature sum on VPU/XLU (tiny FLOPs; keep MXU clear).
            context = jnp.sum(weights[:, :, None] * feat_f32, axis=1)  # (BB, F)

            # ---- LSTMCell : emb@W_e + bias already hoisted into eg_ref ----
            gates = (eg_ref[t]
                     + jnp.dot(context.astype(jnp.bfloat16), wc,
                               preferred_element_type=jnp.float32)
                     + jnp.dot(h.astype(jnp.bfloat16), whh,
                               preferred_element_type=jnp.float32))    # (BB, 4H)
            i_g = jax.nn.sigmoid(gates[:, 0:H])
            f_g = jax.nn.sigmoid(gates[:, H:2 * H])
            g_g = jnp.tanh(gates[:, 2 * H:3 * H])
            o_g = jax.nn.sigmoid(gates[:, 3 * H:4 * H])
            c_new = f_g * c + i_g * g_g
            h_new = o_g * jnp.tanh(c_new)
            # TODO(synk): reference applies F.dropout(h, p=0.5) (stochastic);
            # implemented as identity (eval semantics) so the kernel is deterministic.

            h_out_ref[t] = h_new.astype(h_out_ref.dtype)      # vocab proj later
            attn_ref[t] = weights.astype(attn_ref.dtype)      # bf16 writeback
            return (h_new, c_new)

        lax.fori_loop(0, seq_len, step, (h0, c0), unroll=2)

    return decoder_kernel


# --------------------------------------------------------------------------
# Wrapper: embedding gather, bf16 staging, padding, pallas_calls.
# --------------------------------------------------------------------------
def decoder_rnn_forward(features, captions, params):
    B, L, F = features.shape
    T = captions.shape[1]
    seq_len = T - 1
    V, E = params["emb"].shape
    H = params["Uw"].shape[0]
    bf16 = jnp.bfloat16

    num_tc, vmem_limit, use_bf16_tanh, is_v7 = _device_config()

    # --- parameter staging: bf16 matmul operands ---
    Ww = params["Ww"].astype(bf16)
    Wb = params["Wb"]
    Uw = params["Uw"].astype(bf16)
    Ub = params["Ub"]
    vw = params["vw"]                      # element-wise path -> stays f32
    vb = params["vb"]
    w_e = params["wih_e"].astype(bf16)     # (E, 4H)
    w_c = params["wih_c"].astype(bf16)     # (F, 4H)
    w_hh = params["whh"].astype(bf16)      # (H, 4H)
    b_gate = params["bih"] + params["bhh"]  # (1, 4H) f32, folded into emb_gates
    ihw = params["ihw"].astype(bf16)
    ihb = params["ihb"]
    icw = params["icw"].astype(bf16)
    icb = params["icb"]
    fcw = params["fcw"].astype(bf16)
    fcb = params["fcb"]

    # --- activation staging (nn.Embedding gather stays in XLA) ---
    emb_tm = jnp.transpose(params["emb"][captions[:, :seq_len]],
                           (1, 0, 2)).astype(bf16)            # (seq_len, B, E)
    feat_bf = features.astype(bf16)                           # (B, L, F)

    # Pad batch to a sublane multiple (8); pad L to a sublane multiple too
    # (padded feature rows are zero; scores are masked in-kernel).
    B_pad = ((B + 7) // 8) * 8
    L_pad = ((L + 7) // 8) * 8
    if B_pad != B:
        feat_bf = jnp.pad(feat_bf, ((0, B_pad - B), (0, 0), (0, 0)))
        emb_tm = jnp.pad(emb_tm, ((0, 0), (0, B_pad - B), (0, 0)))
    if L_pad != L:
        feat_bf = jnp.pad(feat_bf, ((0, 0), (0, L_pad - L), (0, 0)))

    # --- hoisted embedding -> LSTM gate contribution (one full-fill matmul) ---
    emb_gates = dense(emb_tm.reshape(seq_len * B_pad, E), w_e, b_gate,
                      jnp.float32, vmem_limit)                # (seq_len*B_pad, 4H)
    emb_gates = emb_gates.reshape(seq_len, B_pad, 4 * H)

    # Batch-block split only where it buys real parallelism (v7x megacore) and
    # keeps a useful MXU row fill per core; v5e/v6e: single grid step.
    BB = B_pad
    if num_tc == 2 and B_pad % 16 == 0 and (B_pad // 2) >= 128:
        BB = B_pad // 2
    nbb = B_pad // BB

    # On v7x (64 MiB VMEM) with a trivially short grid, don't double-buffer the
    # big activation blocks.
    single_buf = is_v7 and nbb <= 2

    def act_spec(shape, index_map):
        if single_buf:
            return pl.BlockSpec(shape, index_map, pipeline_mode=pl.Buffered(1))
        return pl.BlockSpec(shape, index_map)

    grid_spec = pltpu.PrefetchScalarGridSpec(
        num_scalar_prefetch=0,
        grid=(nbb,),
        in_specs=[
            act_spec((BB, L_pad, F), lambda b: (b, 0, 0)),          # features
            act_spec((seq_len, BB, 4 * H), lambda b: (0, b, 0)),    # emb gates
            _vmem_resident(), _vmem_resident(),                      # Ww, Wb
            _vmem_resident(), _vmem_resident(),                      # Uw, Ub
            _vmem_resident(), _vmem_resident(),                      # vw, vb
            _vmem_resident(), _vmem_resident(),                      # w_c, w_hh
            _vmem_resident(), _vmem_resident(),                      # ihw, ihb
            _vmem_resident(), _vmem_resident(),                      # icw, icb
        ],
        out_specs=[
            pl.BlockSpec((seq_len, BB, H), lambda b: (0, b, 0)),     # h_t (bf16)
            pl.BlockSpec((seq_len, BB, L_pad), lambda b: (0, b, 0)),  # attn (bf16)
        ],
    )

    h_tm, attn_tm = pl.pallas_call(
        _make_decoder_kernel(L, L_pad, use_bf16_tanh),
        out_shape=(jax.ShapeDtypeStruct((seq_len, B_pad, H), bf16),
                   jax.ShapeDtypeStruct((seq_len, B_pad, L_pad), bf16)),
        grid_spec=grid_spec,
        compiler_params=pltpu.CompilerParams(
            dimension_semantics=("parallel",),
            vmem_limit_bytes=vmem_limit),
    )(feat_bf, emb_gates, Ww, Wb, Uw, Ub, vw, vb,
      w_c, w_hh, ihw, ihb, icw, icb)

    # ---- fc over all rows at once, tiled over rows AND vocab columns ----
    M = seq_len * B_pad
    logits = dense(h_tm.reshape(M, H), fcw, fcb, jnp.float32, vmem_limit)

    # Back to PyTorch layout, dropping batch/L padding.
    outputs = jnp.transpose(logits.reshape(seq_len, B_pad, V), (1, 0, 2))[:B]
    atten_weights = jnp.transpose(attn_tm.astype(jnp.float32),
                                  (1, 0, 2))[:B, :, :L]
    return outputs, atten_weights


# --------------------------------------------------------------------------
# Deterministic parameter init (shapes from DecoderRNN.__init__), pre-transposed
# to (in, out) so the kernels do x @ W.
# --------------------------------------------------------------------------
def init_params(key, F, E, H, V):
    ks = jax.random.split(key, 24)

    def unif(k, shape, fan_in):
        b = 1.0 / (fan_in ** 0.5)
        return jax.random.uniform(k, shape, jnp.float32, -b, b)

    in_lstm = E + F
    w_ih = unif(ks[8], (in_lstm, 4 * H), H)        # LSTMCell weight_ih^T
    p = {
        "emb": jax.random.normal(ks[0], (V, E), jnp.float32),   # nn.Embedding ~ N(0,1)
        # Attention
        "Ww": unif(ks[1], (F, H), F),  "Wb": unif(ks[2], (1, H), F),
        "Uw": unif(ks[3], (H, H), H),  "Ub": unif(ks[4], (1, H), H),
        "vw": unif(ks[5], (1, H), H),  "vb": unif(ks[6], (1, 1), H),
        # LSTMCell (gate order i, f, g, o)
        "wih_e": w_ih[:E],  "wih_c": w_ih[E:],
        "bih": unif(ks[9], (1, 4 * H), H),
        "whh": unif(ks[10], (H, 4 * H), H),
        "bhh": unif(ks[11], (1, 4 * H), H),
        # fc
        "fcw": unif(ks[12], (H, V), H), "fcb": unif(ks[13], (1, V), H),
        # init_h / init_c
        "ihw": unif(ks[14], (F, H), F), "ihb": unif(ks[15], (1, H), F),
        "icw": unif(ks[16], (F, H), F), "icb": unif(ks[17], (1, H), F),
    }
    return p


# --------------------------------------------------------------------------
# Pure-JAX f32 reference (same math as the PyTorch module, dropout = identity).
# --------------------------------------------------------------------------
def decoder_rnn_reference(features, captions, params):
    B, L, F = features.shape
    T = captions.shape[1]
    seq_len = T - 1
    H = params["Uw"].shape[0]
    emb = params["emb"][captions]
    fmean = jnp.mean(features, axis=1)
    h = fmean @ params["ihw"] + params["ihb"]
    c = fmean @ params["icw"] + params["icb"]
    outs, attns = [], []
    for i in range(seq_len):
        w = features @ params["Ww"] + params["Wb"]
        u = h @ params["Uw"] + params["Ub"]
        t = jnp.tanh(w + u[:, None, :])
        scores = jnp.sum(t * params["vw"], axis=-1) + params["vb"]
        weights = jax.nn.softmax(scores, axis=1)
        context = jnp.sum(weights[:, :, None] * features, axis=1)
        gates = (emb[:, i, :] @ params["wih_e"] + context @ params["wih_c"]
                 + h @ params["whh"] + params["bih"] + params["bhh"])
        i_g = jax.nn.sigmoid(gates[:, 0:H])
        f_g = jax.nn.sigmoid(gates[:, H:2 * H])
        g_g = jnp.tanh(gates[:, 2 * H:3 * H])
        o_g = jax.nn.sigmoid(gates[:, 3 * H:4 * H])
        c = f_g * c + i_g * g_g
        h = o_g * jnp.tanh(c)
        outs.append(h @ params["fcw"] + params["fcb"])
        attns.append(weights)
    return jnp.stack(outs, axis=1), jnp.stack(attns, axis=1)


if __name__ == "__main__":
    B, L, F, E, H, V, T = 2, 8, 16, 16, 32, 64, 9   # seq_len = T - 1 = 8
    key = jax.random.PRNGKey(0)
    kf, kc, kp = jax.random.split(key, 3)
    features = jax.random.normal(kf, (B, L, F), jnp.float32)
    captions = jax.random.randint(kc, (B, T), 0, V, dtype=jnp.int32)
    params = init_params(kp, F, E, H, V)

    outputs, atten_weights = decoder_rnn_forward(features, captions, params)
    jax.block_until_ready((outputs, atten_weights))

    ref_out, ref_attn = decoder_rnn_reference(features, captions, params)
    assert outputs.shape == (B, T - 1, V) and atten_weights.shape == (B, T - 1, L)
    # bf16 matmul inputs (f32 accumulation), bf16 tanh on v6e/v7x, bf16 attn
    # store and approx reciprocal -> looser tolerances than pure-f32, still far
    # tighter than any semantic error.
    assert jnp.allclose(outputs, ref_out, atol=1e-1, rtol=1e-1), \
        float(jnp.max(jnp.abs(outputs - ref_out)))
    assert jnp.allclose(atten_weights, ref_attn, atol=5e-2, rtol=5e-2), \
        float(jnp.max(jnp.abs(atten_weights - ref_attn)))
    print("KERNEL_OK")
</pallas_src>

<mosaic_0001>
module attributes {stable_mosaic.version = 11 : i64} {
  func.func @dense_kernel(%arg0: i32, %arg1: i32, %arg2: memref<64x16xbf16, #tpu.memory_space<vmem>>, %arg3: memref<16x128xbf16, #tpu.memory_space<vmem>>, %arg4: memref<1x128xf32, #tpu.memory_space<vmem>>, %arg5: memref<64x128xf32, #tpu.memory_space<vmem>>) attributes {dimension_semantics = [#tpu.dimension_semantics<parallel>, #tpu.dimension_semantics<parallel>], iteration_bounds = array<i64: 1, 1>, scalar_prefetch = 0 : i64, scratch_operands = 0 : i64, tpu.core_type = #tpu.core_type<tc>, window_params = [{transform_indices = @transform_0, window_bounds = array<i64: 64, 16>}, {transform_indices = @transform_1, window_bounds = array<i64: 16, 128>}, {transform_indices = @transform_2, window_bounds = array<i64: 1, 128>}, {transform_indices = @transform_3, window_bounds = array<i64: 64, 128>}]} {
    %c0 = arith.constant 0 : index
    %c0_0 = arith.constant 0 : index
    %0 = vector.load %arg2[%c0, %c0_0] : memref<64x16xbf16, #tpu.memory_space<vmem>>, vector<64x16xbf16>
    %c0_1 = arith.constant 0 : index
    %c0_2 = arith.constant 0 : index
    %1 = vector.load %arg3[%c0_1, %c0_2] : memref<16x128xbf16, #tpu.memory_space<vmem>>, vector<16x128xbf16>
    %cst = arith.constant dense<0.000000e+00> : vector<64x128xf32>
    %2 = tpu.matmul %0, %1, %cst {dimension_numbers = #tpu.dot_dimension_numbers<[1], [0], [0], [1], [0, 0, 1, 1], [], []>} : vector<64x16xbf16>, vector<16x128xbf16>, vector<64x128xf32> -> vector<64x128xf32>
    %c0_3 = arith.constant 0 : index
    %c0_4 = arith.constant 0 : index
    %3 = vector.load %arg4[%c0_3, %c0_4] : memref<1x128xf32, #tpu.memory_space<vmem>>, vector<1x128xf32>
    %4 = vector.broadcast %3 : vector<1x128xf32> to vector<64x128xf32>
    %5 = arith.addf %2, %4 : vector<64x128xf32>
    %c0_5 = arith.constant 0 : index
    %c0_6 = arith.constant 0 : index
    %6 = vector.load %arg5[%c0_5, %c0_6] : memref<64x128xf32, #tpu.memory_space<vmem>>, vector<64x128xf32>
    tpu.vector_store %arg5[%c0_5, %c0_6], %5 {strides = array<i32>} : memref<64x128xf32, #tpu.memory_space<vmem>>, vector<64x128xf32>,
    return
  }
  func.func @transform_0(%arg0: i32, %arg1: i32) -> (i32, i32) {
    %c0_i32 = arith.constant 0 : i32
    %c0_i32_0 = arith.constant 0 : i32
    return %arg0, %c0_i32 : i32, i32
  }
  func.func @transform_1(%arg0: i32, %arg1: i32) -> (i32, i32) {
    %c0_i32 = arith.constant 0 : i32
    %c0_i32_0 = arith.constant 0 : i32
    return %c0_i32, %arg1 : i32, i32
  }
  func.func @transform_2(%arg0: i32, %arg1: i32) -> (i32, i32) {
    %c0_i32 = arith.constant 0 : i32
    %c0_i32_0 = arith.constant 0 : i32
    return %c0_i32, %arg1 : i32, i32
  }
  func.func @transform_3(%arg0: i32, %arg1: i32) -> (i32, i32) {
    %c0_i32 = arith.constant 0 : i32
    return %arg0, %arg1 : i32, i32
  }
}

</mosaic_0001>

<llo_original>
// kernel: tpu_custom_call.1
$region0: #{tpu_custom_call.1}
  #allocation0 [shape = 'u32[]', space=smem, size = 0x4, offset = 0x4, fixed_abs, tag = 'smem constant byte address 0x4 - core index']
  #allocation1 [shape = 'u32[72,128]{1,0:T(1,128)}', space=vmem, size = 0x9000, scoped, tag = 'internal scratch']
  %s0 = inlined_call_operand.vmem [shape: bf16[64,16], index: 0, kind: input, shape index: {}]
  %s1 = inlined_call_operand.vmem [shape: bf16[16,128], index: 1, kind: input, shape index: {}]
  %s2 = inlined_call_operand.vmem [shape: f32[1,128], index: 2, kind: input, shape index: {}]
  %s3 = inlined_call_operand.hbm [shape: f32[64,128], index: 3, kind: output, shape index: {}]
  %s4 = sld [smem:[#allocation0]]
  $region22: #{tpu_custom_call.1} parent=0
    _
  %s6 = ssub.s32 1, %s4
  %s7 = scalar_select 0, %s6, %s4
  $region1: #{tpu_custom_call.1} parent=0
    #allocation2 [shape = 'u8[32768]{0}', space=vmem, size = 0x8000, scoped, tag = 'output window, operand 0, single buffered']
    #allocation3 [shape = 's32[1]{0}', space=sflag, size = 0x4, scoped, tag = 'scoped memory for tpu_custom_call.1']
    %8 = vsyncpa [#allocation3], 0
    // Predicated region
    $region2: #{tpu_custom_call.1} parent=1 // pred_check
      _
    $region3: #{tpu_custom_call.1} parent=1 // pred_check_branch
      %10 = sbr.rel (0) target = $region5
    $region4: #{tpu_custom_call.1} parent=1 // pred_region
      _
    $region5: #{tpu_custom_call.1} parent=1 // pred_fallthru
      _
    // Predicated region
    $region6: #{tpu_custom_call.1} parent=1 // pred_check
      _
    $region7: #{tpu_custom_call.1} parent=1 // pred_check_branch
      %12 = sbr.rel (0) target = $region9
    $region8: #{tpu_custom_call.1} parent=1 // pred_region
      _
    $region9: #{tpu_custom_call.1} parent=1 // pred_fallthru
      _
    // Predicated region
    $region10: #{tpu_custom_call.1} parent=1 // pred_check
      _
    $region11: #{tpu_custom_call.1} parent=1 // pred_check_branch
      %14 = sbr.rel (0) target = $region13
    $region12: #{tpu_custom_call.1} parent=1 // pred_region
      _
    $region13: #{tpu_custom_call.1} parent=1 // pred_fallthru
      _
    %v16 = vld [vmem:[%s0] sm:$0xf]
    %v17 = vld [vmem:[%s0 + $0x4] sm:$0xf]
    %v18 = vld [vmem:[%s0 + $0x8] sm:$0xf]
    %v19 = vld [vmem:[%s0 + $0xc] sm:$0xf]
    %v20 = vld [vmem:[%s0 + $0x10] sm:$0xf]
    %v21 = vld [vmem:[%s0 + $0x14] sm:$0xf]
    %v22 = vld [vmem:[%s0 + $0x18] sm:$0xf]
    %v23 = vld [vmem:[%s0 + $0x1c] sm:$0xf]
    %v24 = vld [vmem:[%s1] sm:$0xf]
    %v25 = vld [vmem:[%s1 + $0x4] sm:$0xf]
    %v26 = vld [vmem:[%s2] sm:$0x1]
    %v28 = vperm.slane %v26, 0
    %v38 = vunpack.c.l.b16 %v16
    %v39 = vunpack.c.l.b16 %v17
    %v40 = vunpack.c.l.b16 %v18
    %v41 = vunpack.c.l.b16 %v19
    %v42 = vunpack.c.l.b16 %v20
    %v43 = vunpack.c.l.b16 %v21
    %v44 = vunpack.c.l.b16 %v22
    %v45 = vunpack.c.l.b16 %v23
    %v46 = vpack.c.b16 %v39, %v38
    %v47 = vpack.c.b16 %v41, %v40
    %v48 = vpack.c.b16 %v43, %v42
    %v49 = vpack.c.b16 %v45, %v44
    %v52 = vunpack.c.l.b16 %v24
    %v53 = vunpack.c.l.b16 %v25
    %v54 = vpack.c.b16 %v53, %v52
    %vm56 = vcmask 130048
    %v58 = vsel %vm56, %v46, 0
    %v61 = vsel %vm56, %v47, 0
    %v64 = vsel %vm56, %v48, 0
    %v67 = vsel %vm56, %v49, 0
    %69 = vmatpush.bf16.msra.mxu0 0
    %70 = vmatpush.bf16.msra.mxu0 0
    %71 = vmatpush.bf16.msra.mxu0 0
    %72 = vmatpush.bf16.msra.mxu0 0
    %73 = vmatpush.bf16.msra.mxu0 0
    %74 = vmatpush.bf16.msra.mxu0 0
    %75 = vmatpush.bf16.msra.mxu0 0
    %76 = vmatpush.bf16.msra.mxu0 %v54
    %77 = vmatmul.bf16.gmra.mxu0 %v58
    %v78 = vpop.f32.mrf.mxu0
    %v79 = vadd.f32 %v28, %v78
    %v80 = vpop.f32.mrf.mxu0
    %v81 = vadd.f32 %v28, %v80
    %82 = vmatmul.bf16.gmra.mxu0 %v61
    %v83 = vpop.f32.mrf.mxu0
    %v84 = vadd.f32 %v28, %v83
    %v85 = vpop.f32.mrf.mxu0
    %v86 = vadd.f32 %v28, %v85
    %87 = vmatmul.bf16.gmra.mxu0 %v64
    %v88 = vpop.f32.mrf.mxu0
    %v89 = vadd.f32 %v28, %v88
    %v90 = vpop.f32.mrf.mxu0
    %v91 = vadd.f32 %v28, %v90
    %92 = vmatmul.bf16.gmra.mxu0 %v67
    %v93 = vpop.f32.mrf.mxu0
    %v94 = vadd.f32 %v28, %v93
    %v95 = vpop.f32.mrf.mxu0
    %v96 = vadd.f32 %v28, %v95
    %97 = vdwg.mxu0
    %98 = vst [vmem:[#allocation2] sm:$0xff] %v79
    %99 = vst [vmem:[#allocation2 + $0x8] sm:$0xff] %v81
    %100 = vst [vmem:[#allocation2 + $0x10] sm:$0xff] %v84
    %101 = vst [vmem:[#allocation2 + $0x18] sm:$0xff] %v86
    %102 = vst [vmem:[#allocation2 + $0x20] sm:$0xff] %v89
    %103 = vst [vmem:[#allocation2 + $0x28] sm:$0xff] %v91
    %104 = vst [vmem:[#allocation2 + $0x30] sm:$0xff] %v94
    %105 = vst [vmem:[#allocation2 + $0x38] sm:$0xff] %v96
    // Predicated region
    $region14: #{tpu_custom_call.1} parent=1 // pred_check
      _
    $region15: #{tpu_custom_call.1} parent=1 // pred_check_branch
      %107 = sbr.rel (0) target = $region17
    $region16: #{tpu_custom_call.1} parent=1 // pred_region
      %109 = vsyncadd [#allocation3], 0
      %s110 = sshll.u32 [#allocation2], 4
      %s111 = int_to_ptr.vmem [resolvable:$true] %s110
      %s112 = sshll.u32 %s3, 4
      %s113 = int_to_ptr.hbm [resolvable:$true] %s112
      %118 = dma.vmem_to_hbm [thread:$0]  %s111, 1024, %s113, [#allocation3], 128, 128, 8
    $region17: #{tpu_custom_call.1} parent=1 // pred_fallthru
      _
    // Predicated region
    $region18: #{tpu_custom_call.1} parent=1 // pred_check
      _
    $region19: #{tpu_custom_call.1} parent=1 // pred_check_branch
      %120 = sbr.rel (0) target = $region21
    $region20: #{tpu_custom_call.1} parent=1 // pred_region
      %122 = dma.done [#allocation3], 1024
    $region21: #{tpu_custom_call.1} parent=1 // pred_fallthru
      _
    %123 = vsyncpa [#allocation3], 1

</llo_original>
